<compile_context>
chip_gen: v7x
topology: tpu7x:2x2x1
jax: 0.10.0
libtpu: 0.0.40
codegen_flags: <defaults>
</compile_context>

<pallas_src>
import jax
import jax.numpy as jnp
import numpy as np
from jax.experimental import pallas as pl
from jax.experimental.pallas import tpu as pltpu

IN = 3            # input_size (wavevector components)
H = 10            # hidden_layer_size
DEGREE = 3        # degree
FEAT = IN * DEGREE          # 9
HP = 16           # padded hidden/feature dim (multiple of 8 sublanes)
TILE_N = 512      # lanes per grid step (multiple of 512: whole MXU passes on
                  # v5e/v6e/v7x, unmasked stores, per-step overhead amortized)


def net_simple_kernel(scale_ref, kt_ref, w_ref, o_ref):
    # scale_ref: (1, 1) f32 in SMEM  — exp(-kk), kk is global over ALL of k
    # kt_ref   : (IN, TILE_N)        — components on sublanes, batch on lanes
    # w_ref    : (4, HP, HP)         — [W0 degree-major, W1, W2, W3], zero-padded
    # o_ref    : (1, TILE_N)         — lane-dense output tile
    n = kt_ref.shape[1]
    kt = kt_ref[...]                                   # (3, n)   power 1
    k2 = kt * kt                                       # (3, n)   power 2  (VPU)
    k3 = k2 * kt                                       # (3, n)   power 3  (VPU)
    zpad = jnp.zeros((HP - FEAT, n), jnp.float32)
    feats = jnp.concatenate([kt, k2, k3, zpad], axis=0)   # (16, n) degree-major

    # Four MXU pushes; pad rows/cols are zero so the padded math is exact.
    h = jnp.tanh(jnp.dot(w_ref[0], feats, preferred_element_type=jnp.float32))  # (16, n)
    h = jnp.tanh(jnp.dot(w_ref[1], h, preferred_element_type=jnp.float32))      # (16, n)
    h = jnp.tanh(jnp.dot(w_ref[2], h, preferred_element_type=jnp.float32))      # (16, n)
    y = jnp.dot(w_ref[3], h, preferred_element_type=jnp.float32)[0:1, :]        # (1, n)

    o_ref[...] = jnp.tanh(y) * scale_ref[0, 0]


def _pack_weights(W0, W1, W2, W3):
    """One zero-padded (4, HP, HP) block; W0 columns permuted to degree-major."""
    # torch feature ordering is component-major: col = c*DEGREE + d.
    # In-kernel feats are degree-major: row = d*IN + c.  Permute once here.
    perm = np.array([c * DEGREE + d for d in range(DEGREE) for c in range(IN)])
    W0p = jnp.asarray(W0)[:, perm]                        # (H, FEAT) degree-major
    Wall = jnp.zeros((4, HP, HP), jnp.float32)
    Wall = Wall.at[0, :H, :FEAT].set(W0p)
    Wall = Wall.at[1, :H, :H].set(W1)
    Wall = Wall.at[2, :H, :H].set(W2)
    Wall = Wall.at[3, :1, :H].set(W3)
    return Wall


def net_simple_forward(k, W0, W1, W2, W3, tile_n=TILE_N):
    """k: (N, 3) float32.  W*: torch-layout weights (out_features, in_features)."""
    n = k.shape[0]

    # kk is the p=-1 norm over ALL elements of k -> must be computed from the
    # full, untiled k (recomputing it per N-tile would be wrong), so it is done
    # here and passed in as a (1,1) SMEM scalar.  Note: 1/|k| is inf for an
    # exactly-zero component, collapsing kk to 0 and scale to 1 — this matches
    # the torch p=-1 norm behavior.
    kk = 1.0 / jnp.sum(1.0 / jnp.abs(k))
    scale = jnp.exp(-kk).astype(jnp.float32).reshape(1, 1)

    # Pad the batch to a multiple of tile_n lanes (zero padding is safe: the
    # kernel never divides by k, and padded lanes are sliced off below).
    n_pad = ((n + tile_n - 1) // tile_n) * tile_n
    kt = jnp.zeros((IN, n_pad), jnp.float32).at[:, :n].set(k.T)

    Wall = _pack_weights(W0, W1, W2, W3)

    out = pl.pallas_call(
        net_simple_kernel,
        out_shape=jax.ShapeDtypeStruct((1, n_pad), jnp.float32),
        grid=(n_pad // tile_n,),
        in_specs=[
            pl.BlockSpec(memory_space=pltpu.MemorySpace.SMEM),      # scale (1,1)
            pl.BlockSpec((IN, tile_n), lambda i: (0, i)),           # kt N-tile
            pl.BlockSpec((4, HP, HP), lambda i: (0, 0, 0)),         # weights pinned
        ],
        out_specs=pl.BlockSpec((1, tile_n), lambda i: (0, i)),
        compiler_params=pltpu.CompilerParams(
            dimension_semantics=("parallel",)),                     # 2 TCs on v7x
    )(scale, kt, Wall)
    return out[0, :n]


def net_simple_reference(k, W0, W1, W2, W3):
    """Plain-JAX mirror of the torch forward (float32)."""
    kk = 1.0 / jnp.sum(1.0 / jnp.abs(k))
    power = jnp.arange(1, DEGREE + 1, dtype=k.dtype)
    x = (k[..., None] ** power).reshape(k.shape[0], FEAT)
    h = jnp.tanh(x @ W0.T)
    h = jnp.tanh(h @ W1.T)
    h = jnp.tanh(h @ W2.T)
    y = jnp.tanh(h @ W3.T)
    return y[:, 0] * jnp.exp(-kk)


if __name__ == "__main__":
    key = jax.random.PRNGKey(0)
    kk_, s0, s1, s2, s3 = jax.random.split(key, 5)

    N = 1024   # wavevector batch: 2 grid steps of 512 lanes each

    # Deterministic inputs / parameters (uniform in +-1/sqrt(fan_in), torch-like).
    k = jax.random.normal(kk_, (N, IN), dtype=jnp.float32)
    W0 = jax.random.uniform(s0, (H, FEAT), jnp.float32, -1.0, 1.0) / np.sqrt(FEAT)
    W1 = jax.random.uniform(s1, (H, H), jnp.float32, -1.0, 1.0) / np.sqrt(H)
    W2 = jax.random.uniform(s2, (H, H), jnp.float32, -1.0, 1.0) / np.sqrt(H)
    W3 = jax.random.uniform(s3, (1, H), jnp.float32, -1.0, 1.0) / np.sqrt(H)

    out = net_simple_forward(k, W0, W1, W2, W3)
    out = jax.block_until_ready(out)

    ref = net_simple_reference(k, W0, W1, W2, W3)
    np.testing.assert_allclose(np.asarray(out), np.asarray(ref), rtol=1e-3, atol=1e-4)

    print("KERNEL_OK")
</pallas_src>

<mosaic_0001>
module attributes {stable_mosaic.version = 11 : i64} {
  func.func @net_simple_kernel(%arg0: i32, %arg1: memref<1x1xf32, #tpu.memory_space<smem>>, %arg2: memref<3x512xf32, #tpu.memory_space<vmem>>, %arg3: memref<4x16x16xf32, #tpu.memory_space<vmem>>, %arg4: memref<1x512xf32, #tpu.memory_space<vmem>>) attributes {dimension_semantics = [#tpu.dimension_semantics<parallel>], iteration_bounds = array<i64: 2>, scalar_prefetch = 0 : i64, scratch_operands = 0 : i64, tpu.core_type = #tpu.core_type<tc>, window_params = [{transform_indices = @transform_0, window_bounds = array<i64: 1, 1>}, {transform_indices = @transform_1, window_bounds = array<i64: 3, 512>}, {pipeline_mode = #tpu.pipeline_mode<synchronous>, transform_indices = @transform_2, window_bounds = array<i64: 4, 16, 16>}, {transform_indices = @transform_3, window_bounds = array<i64: 1, 512>}]} {
    %c0 = arith.constant 0 : index
    %c0_0 = arith.constant 0 : index
    %0 = vector.load %arg2[%c0, %c0_0] : memref<3x512xf32, #tpu.memory_space<vmem>>, vector<3x512xf32>
    %1 = arith.mulf %0, %0 : vector<3x512xf32>
    %2 = arith.mulf %1, %0 : vector<3x512xf32>
    %cst = arith.constant 0.000000e+00 : f32
    %3 = vector.broadcast %cst : f32 to vector<7x512xf32>
    %4 = tpu.concatenate %0, %1, %2, %3 in 0 : vector<3x512xf32>, vector<3x512xf32>, vector<3x512xf32>, vector<7x512xf32> -> vector<16x512xf32>
    %c0_1 = arith.constant 0 : index
    %c0_2 = arith.constant 0 : index
    %c0_3 = arith.constant 0 : index
    %5 = vector.load %arg3[%c0_1, %c0_2, %c0_3] : memref<4x16x16xf32, #tpu.memory_space<vmem>>, vector<1x16x16xf32>
    %6 = vector.shape_cast %5 : vector<1x16x16xf32> to vector<16x16xf32>
    %cst_4 = arith.constant dense<0.000000e+00> : vector<16x512xf32>
    %7 = tpu.matmul %6, %4, %cst_4 {dimension_numbers = #tpu.dot_dimension_numbers<[1], [0], [0], [1], [0, 0, 1, 1], [], []>} : vector<16x16xf32>, vector<16x512xf32>, vector<16x512xf32> -> vector<16x512xf32>
    %8 = math.tanh %7 : vector<16x512xf32>
    %c1 = arith.constant 1 : index
    %c0_5 = arith.constant 0 : index
    %c0_6 = arith.constant 0 : index
    %9 = vector.load %arg3[%c1, %c0_5, %c0_6] : memref<4x16x16xf32, #tpu.memory_space<vmem>>, vector<1x16x16xf32>
    %10 = vector.shape_cast %9 : vector<1x16x16xf32> to vector<16x16xf32>
    %cst_7 = arith.constant dense<0.000000e+00> : vector<16x512xf32>
    %11 = tpu.matmul %10, %8, %cst_7 {dimension_numbers = #tpu.dot_dimension_numbers<[1], [0], [0], [1], [0, 0, 1, 1], [], []>} : vector<16x16xf32>, vector<16x512xf32>, vector<16x512xf32> -> vector<16x512xf32>
    %12 = math.tanh %11 : vector<16x512xf32>
    %c2 = arith.constant 2 : index
    %c0_8 = arith.constant 0 : index
    %c0_9 = arith.constant 0 : index
    %13 = vector.load %arg3[%c2, %c0_8, %c0_9] : memref<4x16x16xf32, #tpu.memory_space<vmem>>, vector<1x16x16xf32>
    %14 = vector.shape_cast %13 : vector<1x16x16xf32> to vector<16x16xf32>
    %cst_10 = arith.constant dense<0.000000e+00> : vector<16x512xf32>
    %15 = tpu.matmul %14, %12, %cst_10 {dimension_numbers = #tpu.dot_dimension_numbers<[1], [0], [0], [1], [0, 0, 1, 1], [], []>} : vector<16x16xf32>, vector<16x512xf32>, vector<16x512xf32> -> vector<16x512xf32>
    %16 = math.tanh %15 : vector<16x512xf32>
    %c3 = arith.constant 3 : index
    %c0_11 = arith.constant 0 : index
    %c0_12 = arith.constant 0 : index
    %17 = vector.load %arg3[%c3, %c0_11, %c0_12] : memref<4x16x16xf32, #tpu.memory_space<vmem>>, vector<1x16x16xf32>
    %18 = vector.shape_cast %17 : vector<1x16x16xf32> to vector<16x16xf32>
    %cst_13 = arith.constant dense<0.000000e+00> : vector<16x512xf32>
    %19 = tpu.matmul %18, %16, %cst_13 {dimension_numbers = #tpu.dot_dimension_numbers<[1], [0], [0], [1], [0, 0, 1, 1], [], []>} : vector<16x16xf32>, vector<16x512xf32>, vector<16x512xf32> -> vector<16x512xf32>
    %20 = vector.extract_strided_slice %19 {offsets = [0, 0], sizes = [1, 512], strides = [1, 1]} : vector<16x512xf32> to vector<1x512xf32>
    %21 = math.tanh %20 : vector<1x512xf32>
    %c0_14 = arith.constant 0 : index
    %c0_15 = arith.constant 0 : index
    %22 = memref.load %arg1[%c0_14, %c0_15] : memref<1x1xf32, #tpu.memory_space<smem>>
    %23 = vector.broadcast %22 : f32 to vector<1x512xf32>
    %24 = arith.mulf %21, %23 : vector<1x512xf32>
    %c0_16 = arith.constant 0 : index
    %c0_17 = arith.constant 0 : index
    %25 = vector.load %arg4[%c0_16, %c0_17] : memref<1x512xf32, #tpu.memory_space<vmem>>, vector<1x512xf32>
    tpu.vector_store %arg4[%c0_16, %c0_17], %24 {strides = array<i32>} : memref<1x512xf32, #tpu.memory_space<vmem>>, vector<1x512xf32>,
    return
  }
  func.func @transform_0(%arg0: i32) -> (i32, i32) {
    %c0_i32 = arith.constant 0 : i32
    %c0_i32_0 = arith.constant 0 : i32
    %c0_i32_1 = arith.constant 0 : i32
    return %c0_i32, %c0_i32_0 : i32, i32
  }
  func.func @transform_1(%arg0: i32) -> (i32, i32) {
    %c0_i32 = arith.constant 0 : i32
    %c0_i32_0 = arith.constant 0 : i32
    return %c0_i32, %arg0 : i32, i32
  }
  func.func @transform_2(%arg0: i32) -> (i32, i32, i32) {
    %c0_i32 = arith.constant 0 : i32
    %c0_i32_0 = arith.constant 0 : i32
    %c0_i32_1 = arith.constant 0 : i32
    %c0_i32_2 = arith.constant 0 : i32
    return %c0_i32, %c0_i32_0, %c0_i32_1 : i32, i32, i32
  }
  func.func @transform_3(%arg0: i32) -> (i32, i32) {
    %c0_i32 = arith.constant 0 : i32
    %c0_i32_0 = arith.constant 0 : i32
    return %c0_i32, %arg0 : i32, i32
  }
}

</mosaic_0001>

<llo_original>
// kernel: tpu_custom_call.1
$region0: #{tpu_custom_call.1}
  #allocation0 [shape = 'u32[]', space=smem, size = 0x4, offset = 0x4, fixed_abs, tag = 'smem constant byte address 0x4 - core index']
  #allocation1 [shape = 'u32[144,128]{1,0:T(1,128)}', space=vmem, size = 0x12000, scoped, tag = 'internal scratch']
  #allocation2 [shape = 'f32[1,1]{1,0:T(1,128)S(6)}', space=smem, size = 0x200, scoped, tag = 'scoped memory for tpu_custom_call.1']
  %s0 = inlined_call_operand.<no memory space> [shape: f32[1,1], index: 0, kind: input, shape index: {}]
  %s1 = inlined_call_operand.hbm [shape: f32[3,1024], index: 1, kind: input, shape index: {}]
  %s2 = inlined_call_operand.hbm [shape: f32[4,16,16], index: 2, kind: input, shape index: {}]
  %s3 = inlined_call_operand.hbm [shape: f32[1,1024], index: 3, kind: output, shape index: {}]
  %s4 = sld [smem:[#allocation0]]
  $region53: #{tpu_custom_call.1} parent=0
    _
  %s6 = ssub.s32 1, %s4
  %s7 = scalar_select 0, %s6, %s4
  %8 = sst [smem:[#allocation2]] %s0
  $region1: #{tpu_custom_call.1} parent=0
    #allocation3 [shape = 'u8[16384]{0}', space=vmem, size = 0x4000, scoped, tag = 'input window, operand 1']
    #allocation4 [shape = 's32[2]{0}', space=sflag, size = 0x8, scoped, tag = 'scoped memory for tpu_custom_call.1']
    #allocation5 [shape = 's32[2]{0}', space=sflag, size = 0x8, scoped, tag = 'scoped memory for tpu_custom_call.1']
    #allocation6 [shape = 'u8[32768]{0}', space=vmem, size = 0x8000, scoped, tag = 'input window, operand 2, single buffered']
    #allocation7 [shape = 's32[1]{0}', space=sflag, size = 0x4, scoped, tag = 'scoped memory for tpu_custom_call.1']
    #allocation8 [shape = 'u8[4096]{0}', space=vmem, size = 0x1000, scoped, tag = 'output window, operand 0']
    %9 = vsyncpa [#allocation4], 0
    %s10 = scalar_lea.sflag [#allocation4], 1
    %11 = vsyncpa %s10, 0
    %12 = vsyncpa [#allocation7], 0
    %13 = vsyncpa [#allocation5], 0
    %s14 = scalar_lea.sflag [#allocation5], 1
    %15 = vsyncpa %s14, 0
    loop: start=0, step=1, limit=4
    $region2: #{tpu_custom_call.1} parent=1 // loop_pre_header
      _
    $region3: #{tpu_custom_call.1} parent=1 // loop_header
      %s17 = sphi 0, %s21
      %p18 = scmp.ge.s32.totalorder %s17, 4
      %s25 = sphi 0, %s25
      %s27 = sphi 0, %s25
      %s28 = sphi 0, %s27
      %s42 = sphi 0, %s28
      %s48 = sphi 0, %s50
      %s51 = sphi 0, %s48
      %s52 = sphi 0, %s51
      %s68 = sphi 0, %s52
      %s72 = sphi 0, %s72
      %s74 = sphi 0, %s72
      %s75 = sphi 0, %s74
      %s89 = sphi 0, %s75
      %s95 = sphi 0, %s97
      %s98 = sphi 0, %s95
      %s99 = sphi 0, %s98
      %s115 = sphi 0, %s99
    $region4: #{tpu_custom_call.1} parent=1 // loop_header_branch
      %20 = sbr.rel (%p18) target = $region8
    $region5: #{tpu_custom_call.1} parent=1 // loop_body
      %s22 = ssub.s32 %s17, 1
      %s23 = ssub.s32 %s17, 2
      %s24 = sadd.s32 %s17, 1
      %s26 = sadd.s32 %s25, 1
      %p29 = scmp.eq.s32.totalorder %s17, 1
      %p30 = scmp.ne.s32.totalorder %s25, %s27
      %p31 = scmp.eq.s32.totalorder %s17, 0
      %p32 = por %p30, %p31
      %p33 = scmp.ne.s32.totalorder %s25, %s27
      %p34 = scmp.eq.s32.totalorder %s22, 1
      %p35 = por %p33, %p34
      %p36 = scmp.ne.s32.totalorder %s27, %s28
      %p37 = scmp.eq.s32.totalorder %s22, 0
      %p38 = por %p36, %p37
      %p39 = scmp.ne.s32.totalorder %s27, %s28
      %p40 = scmp.eq.s32.totalorder %s23, 1
      %p41 = por %p39, %p40
      %p43 = scmp.ne.s32.totalorder %s28, %s42
      %p44 = scmp.eq.s32.totalorder %s23, 0
      %p45 = por %p43, %p44
      %s46 = ssub.s32 %s17, %s24
      %p47 = scmp.eq.s32.totalorder %s46, 0
      %s49 = sadd.s32 %s48, 1
      %s50 = scalar_select %p47, %s48, %s49
      %p53 = pneg %p47
      %p54 = scmp.eq.s32.totalorder %s17, 1
      %p55 = por %p53, %p54
      %p56 = scmp.ne.s32.totalorder %s48, %s51
      %p57 = scmp.eq.s32.totalorder %s17, 0
      %p58 = por %p56, %p57
      %p59 = scmp.ne.s32.totalorder %s48, %s51
      %p60 = scmp.eq.s32.totalorder %s22, 1
      %p61 = por %p59, %p60
      %p62 = scmp.ne.s32.totalorder %s51, %s52
      %p63 = scmp.eq.s32.totalorder %s22, 0
      %p64 = por %p62, %p63
      %p65 = scmp.ne.s32.totalorder %s51, %s52
      %p66 = scmp.eq.s32.totalorder %s23, 1
      %p67 = por %p65, %p66
      %p69 = scmp.ne.s32.totalorder %s52, %s68
      %p70 = scmp.eq.s32.totalorder %s23, 0
      %p71 = por %p69, %p70
      %s73 = sadd.s32 %s72, 1
      %p76 = scmp.eq.s32.totalorder %s17, 1
      %p77 = scmp.ne.s32.totalorder %s72, %s74
      %p78 = scmp.eq.s32.totalorder %s17, 0
      %p79 = por %p77, %p78
      %p80 = scmp.ne.s32.totalorder %s72, %s74
      %p81 = scmp.eq.s32.totalorder %s22, 1
      %p82 = por %p80, %p81
      %p83 = scmp.ne.s32.totalorder %s74, %s75
      %p84 = scmp.eq.s32.totalorder %s22, 0
      %p85 = por %p83, %p84
      %p86 = scmp.ne.s32.totalorder %s74, %s75
      %p87 = scmp.eq.s32.totalorder %s23, 1
      %p88 = por %p86, %p87
      %p90 = scmp.ne.s32.totalorder %s75, %s89
      %p91 = scmp.eq.s32.totalorder %s23, 0
      %p92 = por %p90, %p91
      %s93 = ssub.s32 %s17, %s24
      %p94 = scmp.eq.s32.totalorder %s93, 0
      %s96 = sadd.s32 %s95, 1
      %s97 = scalar_select %p94, %s95, %s96
      %p100 = pneg %p94
      %p101 = scmp.eq.s32.totalorder %s17, 1
      %p102 = por %p100, %p101
      %p103 = scmp.ne.s32.totalorder %s95, %s98
      %p104 = scmp.eq.s32.totalorder %s17, 0
      %p105 = por %p103, %p104
      %p106 = scmp.ne.s32.totalorder %s95, %s98
      %p107 = scmp.eq.s32.totalorder %s22, 1
      %p108 = por %p106, %p107
      %p109 = scmp.ne.s32.totalorder %s98, %s99
      %p110 = scmp.eq.s32.totalorder %s22, 0
      %p111 = por %p109, %p110
      %p112 = scmp.ne.s32.totalorder %s98, %s99
      %p113 = scmp.eq.s32.totalorder %s23, 1
      %p114 = por %p112, %p113
      %p116 = scmp.ne.s32.totalorder %s99, %s115
      %p117 = scmp.eq.s32.totalorder %s23, 0
      %p118 = por %p116, %p117
      %p119 = scmp.le.s32.totalorder 1, %s17
      %p120 = scmp.lt.s32.totalorder %s17, 3
      %p121 = pnand %p119, %p120
      %p122 = pneg %p121
      // Predicated region
      $region9: #{tpu_custom_call.1} parent=5 // pred_check
        _
      $region10: #{tpu_custom_call.1} parent=5 // pred_check_branch
        %124 = sbr.rel (%p121) target = $region12
      $region11: #{tpu_custom_call.1} parent=5 // pred_region
        %s125 = ssub.s32 %s17, 1
        // Predicated region
        $region13: #{tpu_custom_call.1} parent=11 // pred_check
          %p126 = pneg %p38
        $region14: #{tpu_custom_call.1} parent=11 // pred_check_branch
          %128 = sbr.rel (%p126) target = $region16
        $region15: #{tpu_custom_call.1} parent=11 // pred_region
          _
        $region16: #{tpu_custom_call.1} parent=11 // pred_fallthru
          _
        // Predicated region
        $region17: #{tpu_custom_call.1} parent=11 // pred_check
          %p129 = pneg %p85
        $region18: #{tpu_custom_call.1} parent=11 // pred_check_branch
          %131 = sbr.rel (%p129) target = $region20
        $region19: #{tpu_custom_call.1} parent=11 // pred_region
          %s133 = ssub.s32 1024, 1024
          %134 = vsyncadd [#allocation7], %s133
          %s135 = sshll.u32 [#allocation6], 4
          %s136 = int_to_ptr.vmem [resolvable:$true] %s135
          %141 = dma.hbm_to_vmem [thread:$0]  %s2, 1024, %s136, [#allocation7], 128, 128, 8
        $region20: #{tpu_custom_call.1} parent=11 // pred_fallthru
          _
      $region12: #{tpu_custom_call.1} parent=5 // pred_fallthru
        _
      %p142 = scmp.lt.s32.totalorder %s17, 2
      // Predicated region
      $region21: #{tpu_custom_call.1} parent=5 // pred_check
        %p143 = pneg %p142
      $region22: #{tpu_custom_call.1} parent=5 // pred_check_branch
        %145 = sbr.rel (%p143) target = $region24
      $region23: #{tpu_custom_call.1} parent=5 // pred_region
        // Predicated region
        $region25: #{tpu_custom_call.1} parent=23 // pred_check
          %p146 = pneg %p58
        $region26: #{tpu_custom_call.1} parent=23 // pred_check_branch
          %148 = sbr.rel (%p146) target = $region28
        $region27: #{tpu_custom_call.1} parent=23 // pred_region
          %s149 = sand.u32 %s48, 1
          %s150 = scalar_lea.sflag [#allocation4], %s149
          %s151 = sand.u32 %s48, 1
          %s152 = smul.addr %s151, 16
          %s153 = scalar_lea.vmem [#allocation3], %s152
          %s154 = smul.u32 4, %s17
          %s156 = ssub.s32 256, 256
          %157 = vsyncadd %s150, %s156
          %s158 = smul.addr %s154, 64
          %s159 = scalar_lea.hbm %s1, %s158
          %s161 = sshll.u32 %s153, 4
          %s162 = int_to_ptr.vmem [resolvable:$true] %s161
          %164 = dma.hbm_to_vmem [thread:$0]  %s159, 256, %s162, %s150
        $region28: #{tpu_custom_call.1} parent=23 // pred_fallthru
          _
      $region24: #{tpu_custom_call.1} parent=5 // pred_fallthru
        _
      %p165 = scmp.le.s32.totalorder 1, %s17
      %p166 = scmp.lt.s32.totalorder %s17, 3
      %p167 = pnand %p165, %p166
      %p168 = pneg %p167
      // Predicated region
      $region29: #{tpu_custom_call.1} parent=5 // pred_check
        _
      $region30: #{tpu_custom_call.1} parent=5 // pred_check_branch
        %170 = sbr.rel (%p167) target = $region32
      $region31: #{tpu_custom_call.1} parent=5 // pred_region
        %s171 = ssub.s32 %s17, 1
        %s172 = sand.u32 %s51, 1
        %s173 = scalar_lea.sflag [#allocation4], %s172
        %s174 = sand.u32 %s51, 1
        %s175 = smul.addr %s174, 16
        %s176 = scalar_lea.vmem [#allocation3], %s175
        // Predicated region
        $region33: #{tpu_custom_call.1} parent=31 // pred_check
          %p177 = pneg %p64
        $region34: #{tpu_custom_call.1} parent=31 // pred_check_branch
          %179 = sbr.rel (%p177) target = $region36
        $region35: #{tpu_custom_call.1} parent=31 // pred_region
          %180 = dma.done %s173, 256
        $region36: #{tpu_custom_call.1} parent=31 // pred_fallthru
          _
        // Predicated region
        $region37: #{tpu_custom_call.1} parent=31 // pred_check
          %p181 = pneg %p85
        $region38: #{tpu_custom_call.1} parent=31 // pred_check_branch
          %183 = sbr.rel (%p181) target = $region40
        $region39: #{tpu_custom_call.1} parent=31 // pred_region
          %184 = dma.done [#allocation7], 1024
        $region40: #{tpu_custom_call.1} parent=31 // pred_fallthru
          _
        %p185 = pneg %p38
        %p186 = pneg %p35
        %s187 = sand.u32 %s51, 1
        %s188 = scalar_lea.sflag [#allocation4], %s187
        %s189 = sand.u32 %s51, 1
        %s190 = smul.addr %s189, 16
        %s191 = scalar_lea.vmem [#allocation3], %s190
        %p192 = pneg %p64
        %p193 = pneg %p61
        %p194 = pneg %p85
        %p195 = pneg %p82
        %p196 = pneg %p111
        %p197 = pneg %p108
        %s198 = sand.u32 %s98, 1
        %s199 = scalar_lea.sflag [#allocation5], %s198
        %s200 = sand.u32 %s98, 1
        %s201 = smul.addr %s200, 4
        %s202 = scalar_lea.vmem [#allocation8], %s201
        %s203 = smul.u32 4, %s22
        %s204 = smul.u32 4, %s22
        %v205 = vld [vmem:[%s176] sm:$0x77]
        %v206 = vld [vmem:[%s176 + $0x8] sm:$0x77]
        %v207 = vmul.f32 %v205, %v205
        %v208 = vmul.f32 %v206, %v206
        %v209 = vmul.f32 %v207, %v205
        %v210 = vmul.f32 %v208, %v206
        %v213 = vcombine.high %v205, %v205
        %v214 = vcombine.high %v206, %v206
        %v219 = vcombine.high %v207, %v207
        %v220 = vcombine.high %v208, %v208
        %v221 = vrot.slane %v207, 5
        %v222 = vrot.slane %v219, 5
        %v223 = vrot.slane %v208, 5
        %v224 = vrot.slane %v220, 5
        %v231 = vcombine.high %v209, %v209
        %v232 = vcombine.high %v210, %v210
        %v233 = vrot.slane %v209, 2
        %v234 = vrot.slane %v231, 2
        %v235 = vrot.slane %v210, 2
        %v236 = vrot.slane %v232, 2
        %vm241 = vcmask 1042432
        %v242 = vsel %vm241, %v205, %v221
        %v243 = vsel %vm241, %v213, %v222
        %v244 = vsel %vm241, %v206, %v223
        %v245 = vsel %vm241, %v214, %v224
        %vm246 = vcmask 1045504
        %v247 = vsel %vm246, %v242, %v233
        %v248 = vsel %vm246, %v243, %v234
        %v249 = vsel %vm246, %v244, %v235
        %v250 = vsel %vm246, %v245, %v236
        %vm251 = vcmask 1040384
        %v252 = vsel %vm251, %v233, 0.0
        %v253 = vsel %vm251, %v234, 0.0
        %v254 = vsel %vm251, %v235, 0.0
        %v255 = vsel %vm251, %v236, 0.0
        %v256 = vld [vmem:[#allocation6] sm:$0xff]
        %v257 = vld [vmem:[#allocation6 + $0x8] sm:$0xff]
        %vm258 = vcmask 130048
        %v260 = vsel %vm258, %v256, 0
        %v263 = vsel %vm258, %v257, 0
        %265 = vmatprep.subr.mxu0 %v248
        %266 = vmatpush1.msra.mxu0 %v247
        %267 = vmatprep.subr.mxu0 %v253
        %268 = vmatpush1.msra.mxu0 %v252
        %269 = vmatprep.subr.mxu0 0.0
        %270 = vmatpush1.msra.mxu0 0.0
        %271 = vmatprep.subr.mxu0 0.0
        %272 = vmatpush1.msra.mxu0 0.0
        %273 = vmatprep.subr.mxu0 0.0
        %274 = vmatpush1.msra.mxu0 0.0
        %275 = vmatprep.subr.mxu0 0.0
        %276 = vmatpush1.msra.mxu0 0.0
        %277 = vmatprep.subr.mxu0 0.0
        %278 = vmatpush1.msra.mxu0 0.0
        %279 = vmatprep.subr.mxu0 0.0
        %280 = vmatpush1.msra.mxu0 0.0
        %281 = vmatprep.subr.mxu0 0.0
        %282 = vmatpush1.msra.mxu0 0.0
        %283 = vmatprep.subr.mxu0 0.0
        %284 = vmatpush1.msra.mxu0 0.0
        %285 = vmatprep.subr.mxu0 0.0
        %286 = vmatpush1.msra.mxu0 0.0
        %287 = vmatprep.subr.mxu0 0.0
        %288 = vmatpush1.msra.mxu0 0.0
        %289 = vmatprep.subr.mxu0 0.0
        %290 = vmatpush1.msra.mxu0 0.0
        %291 = vmatprep.subr.mxu0 0.0
        %292 = vmatpush1.msra.mxu0 0.0
        %293 = vmatprep.subr.mxu0 0.0
        %294 = vmatpush1.msra.mxu0 0.0
        %295 = vmatprep.subr.mxu0 0.0
        %296 = vmatpush1.msra.mxu0 0.0
        %297 = vmatprep.subr.mxu0 0.0
        %298 = vmatpush1.msra.mxu0 0.0
        %299 = vmatprep.subr.mxu0 0.0
        %300 = vmatpush1.msra.mxu0 0.0
        %301 = vmatprep.subr.mxu0 0.0
        %302 = vmatpush1.msra.mxu0 0.0
        %303 = vmatprep.subr.mxu0 0.0
        %304 = vmatpush1.msra.mxu0 0.0
        %305 = vmatprep.subr.mxu0 0.0
        %306 = vmatpush1.msra.mxu0 0.0
        %307 = vmatprep.subr.mxu0 0.0
        %308 = vmatpush1.msra.mxu0 0.0
        %309 = vmatprep.subr.mxu0 0.0
        %310 = vmatpush1.msra.mxu0 0.0
        %311 = vmatprep.subr.mxu0 0.0
        %312 = vmatpush1.msra.mxu0 0.0
        %313 = vmatprep.subr.mxu0 0.0
        %314 = vmatpush1.msra.mxu0 0.0
        %315 = vmatprep.subr.mxu0 0.0
        %316 = vmatpush1.msra.mxu0 0.0
        %317 = vmatprep.subr.mxu0 0.0
        %318 = vmatpush1.msra.mxu0 0.0
        %319 = vmatprep.subr.mxu0 0.0
        %320 = vmatpush1.msra.mxu0 0.0
        %321 = vmatprep.subr.mxu0 0.0
        %322 = vmatpush1.msra.mxu0 0.0
        %323 = vmatprep.subr.mxu0 0.0
        %324 = vmatpush1.msra.mxu0 0.0
        %325 = vmatprep.subr.mxu0 0.0
        %326 = vmatpush1.msra.mxu0 0.0
        %327 = vmatprep.subr.mxu0 0.0
        %328 = vmatpush1.msra.mxu0 0.0
        %329 = vmatprep.mubr.f32.mxu0 0.0
        %330 = vmatmul.mubr.f32.gmra.mrb[0].mxu0 %v260
        %v331 = vpop.f32.mrb[0].mxu0
        %v332 = vadd.f32 0.0, %v331
        %v333 = vpop.f32.mrb[0].mxu0
        %v334 = vadd.f32 0.0, %v333
        %335 = vmatprep.mubr.f32.mxu0 0.0
        %336 = vmatmul.mubr.f32.gmra.mrb[0].mxu0 %v263
        %v337 = vpop.f32.mrb[0].mxu0
        %v338 = vadd.f32 0.0, %v337
        %v339 = vpop.f32.mrb[0].mxu0
        %v340 = vadd.f32 0.0, %v339
        %341 = vdwg.mxu0
        %342 = vmatprep.subr.mxu0 %v250
        %343 = vmatpush1.msra.mxu0 %v249
        %344 = vmatprep.subr.mxu0 %v255
        %345 = vmatpush1.msra.mxu0 %v254
        %346 = vmatprep.subr.mxu0 0.0
        %347 = vmatpush1.msra.mxu0 0.0
        %348 = vmatprep.subr.mxu0 0.0
        %349 = vmatpush1.msra.mxu0 0.0
        %350 = vmatprep.subr.mxu0 0.0
        %351 = vmatpush1.msra.mxu0 0.0
        %352 = vmatprep.subr.mxu0 0.0
        %353 = vmatpush1.msra.mxu0 0.0
        %354 = vmatprep.subr.mxu0 0.0
        %355 = vmatpush1.msra.mxu0 0.0
        %356 = vmatprep.subr.mxu0 0.0
        %357 = vmatpush1.msra.mxu0 0.0
        %358 = vmatprep.subr.mxu0 0.0
        %359 = vmatpush1.msra.mxu0 0.0
        %360 = vmatprep.subr.mxu0 0.0
        %361 = vmatpush1.msra.mxu0 0.0
        %362 = vmatprep.subr.mxu0 0.0
        %363 = vmatpush1.msra.mxu0 0.0
        %364 = vmatprep.subr.mxu0 0.0
        %365 = vmatpush1.msra.mxu0 0.0
        %366 = vmatprep.subr.mxu0 0.0
        %367 = vmatpush1.msra.mxu0 0.0
        %368 = vmatprep.subr.mxu0 0.0
        %369 = vmatpush1.msra.mxu0 0.0
        %370 = vmatprep.subr.mxu0 0.0
        %371 = vmatpush1.msra.mxu0 0.0
        %372 = vmatprep.subr.mxu0 0.0
        %373 = vmatpush1.msra.mxu0 0.0
        %374 = vmatprep.subr.mxu0 0.0
        %375 = vmatpush1.msra.mxu0 0.0
        %376 = vmatprep.subr.mxu0 0.0
        %377 = vmatpush1.msra.mxu0 0.0
        %378 = vmatprep.subr.mxu0 0.0
        %379 = vmatpush1.msra.mxu0 0.0
        %380 = vmatprep.subr.mxu0 0.0
        %381 = vmatpush1.msra.mxu0 0.0
        %382 = vmatprep.subr.mxu0 0.0
        %383 = vmatpush1.msra.mxu0 0.0
        %384 = vmatprep.subr.mxu0 0.0
        %385 = vmatpush1.msra.mxu0 0.0
        %386 = vmatprep.subr.mxu0 0.0
        %387 = vmatpush1.msra.mxu0 0.0
        %388 = vmatprep.subr.mxu0 0.0
        %389 = vmatpush1.msra.mxu0 0.0
        %390 = vmatprep.subr.mxu0 0.0
        %391 = vmatpush1.msra.mxu0 0.0
        %392 = vmatprep.subr.mxu0 0.0
        %393 = vmatpush1.msra.mxu0 0.0
        %394 = vmatprep.subr.mxu0 0.0
        %395 = vmatpush1.msra.mxu0 0.0
        %396 = vmatprep.subr.mxu0 0.0
        %397 = vmatpush1.msra.mxu0 0.0
        %398 = vmatprep.subr.mxu0 0.0
        %399 = vmatpush1.msra.mxu0 0.0
        %400 = vmatprep.subr.mxu0 0.0
        %401 = vmatpush1.msra.mxu0 0.0
        %402 = vmatprep.subr.mxu0 0.0
        %403 = vmatpush1.msra.mxu0 0.0
        %404 = vmatprep.subr.mxu0 0.0
        %405 = vmatpush1.msra.mxu0 0.0
        %406 = vmatprep.mubr.f32.mxu0 0.0
        %407 = vmatmul.mubr.f32.gmra.mrb[0].mxu0 %v260
        %v408 = vpop.f32.mrb[0].mxu0
        %v409 = vadd.f32 0.0, %v408
        %v410 = vpop.f32.mrb[0].mxu0
        %v411 = vadd.f32 0.0, %v410
        %412 = vmatprep.mubr.f32.mxu0 0.0
        %413 = vmatmul.mubr.f32.gmra.mrb[0].mxu0 %v263
        %v414 = vpop.f32.mrb[0].mxu0
        %v415 = vadd.f32 0.0, %v414
        %v416 = vpop.f32.mrb[0].mxu0
        %v417 = vadd.f32 0.0, %v416
        %418 = vdwg.mxu0
        %v419 = vtanh.pop %v332
        %v420 = vtanh.pop %v334
        %v421 = vtanh.pop %v409
        %v422 = vtanh.pop %v411
        %v423 = vtanh.pop %v338
        %v424 = vtanh.pop %v340
        %v425 = vtanh.pop %v415
        %v426 = vtanh.pop %v417
        %s427 = scalar_lea.vmem [#allocation6], 16
        %v428 = vld [vmem:[%s427] sm:$0xff]
        %v429 = vld [vmem:[%s427 + $0x8] sm:$0xff]
        %v431 = vsel %vm258, %v428, 0
        %v434 = vsel %vm258, %v429, 0
        %436 = vmatprep.subr.mxu0 %v420
        %437 = vmatpush1.msra.mxu0 %v419
        %438 = vmatprep.subr.mxu0 %v424
        %439 = vmatpush1.msra.mxu0 %v423
        %440 = vmatprep.subr.mxu0 0.0
        %441 = vmatpush1.msra.mxu0 0.0
        %442 = vmatprep.subr.mxu0 0.0
        %443 = vmatpush1.msra.mxu0 0.0
        %444 = vmatprep.subr.mxu0 0.0
        %445 = vmatpush1.msra.mxu0 0.0
        %446 = vmatprep.subr.mxu0 0.0
        %447 = vmatpush1.msra.mxu0 0.0
        %448 = vmatprep.subr.mxu0 0.0
        %449 = vmatpush1.msra.mxu0 0.0
        %450 = vmatprep.subr.mxu0 0.0
        %451 = vmatpush1.msra.mxu0 0.0
        %452 = vmatprep.subr.mxu0 0.0
        %453 = vmatpush1.msra.mxu0 0.0
        %454 = vmatprep.subr.mxu0 0.0
        %455 = vmatpush1.msra.mxu0 0.0
        %456 = vmatprep.subr.mxu0 0.0
        %457 = vmatpush1.msra.mxu0 0.0
        %458 = vmatprep.subr.mxu0 0.0
        %459 = vmatpush1.msra.mxu0 0.0
        %460 = vmatprep.subr.mxu0 0.0
        %461 = vmatpush1.msra.mxu0 0.0
        %462 = vmatprep.subr.mxu0 0.0
        %463 = vmatpush1.msra.mxu0 0.0
        %464 = vmatprep.subr.mxu0 0.0
        %465 = vmatpush1.msra.mxu0 0.0
        %466 = vmatprep.subr.mxu0 0.0
        %467 = vmatpush1.msra.mxu0 0.0
        %468 = vmatprep.subr.mxu0 0.0
        %469 = vmatpush1.msra.mxu0 0.0
        %470 = vmatprep.subr.mxu0 0.0
        %471 = vmatpush1.msra.mxu0 0.0
        %472 = vmatprep.subr.mxu0 0.0
        %473 = vmatpush1.msra.mxu0 0.0
        %474 = vmatprep.subr.mxu0 0.0
        %475 = vmatpush1.msra.mxu0 0.0
        %476 = vmatprep.subr.mxu0 0.0
        %477 = vmatpush1.msra.mxu0 0.0
        %478 = vmatprep.subr.mxu0 0.0
        %479 = vmatpush1.msra.mxu0 0.0
        %480 = vmatprep.subr.mxu0 0.0
        %481 = vmatpush1.msra.mxu0 0.0
        %482 = vmatprep.subr.mxu0 0.0
        %483 = vmatpush1.msra.mxu0 0.0
        %484 = vmatprep.subr.mxu0 0.0
        %485 = vmatpush1.msra.mxu0 0.0
        %486 = vmatprep.subr.mxu0 0.0
        %487 = vmatpush1.msra.mxu0 0.0
        %488 = vmatprep.subr.mxu0 0.0
        %489 = vmatpush1.msra.mxu0 0.0
        %490 = vmatprep.subr.mxu0 0.0
        %491 = vmatpush1.msra.mxu0 0.0
        %492 = vmatprep.subr.mxu0 0.0
        %493 = vmatpush1.msra.mxu0 0.0
        %494 = vmatprep.subr.mxu0 0.0
        %495 = vmatpush1.msra.mxu0 0.0
        %496 = vmatprep.subr.mxu0 0.0
        %497 = vmatpush1.msra.mxu0 0.0
        %498 = vmatprep.subr.mxu0 0.0
        %499 = vmatpush1.msra.mxu0 0.0
        %500 = vmatprep.mubr.f32.mxu0 0.0
        %501 = vmatmul.mubr.f32.gmra.mrb[0].mxu0 %v431
        %v502 = vpop.f32.mrb[0].mxu0
        %v503 = vadd.f32 0.0, %v502
        %v504 = vpop.f32.mrb[0].mxu0
        %v505 = vadd.f32 0.0, %v504
        %506 = vmatprep.mubr.f32.mxu0 0.0
        %507 = vmatmul.mubr.f32.gmra.mrb[0].mxu0 %v434
        %v508 = vpop.f32.mrb[0].mxu0
        %v509 = vadd.f32 0.0, %v508
        %v510 = vpop.f32.mrb[0].mxu0
        %v511 = vadd.f32 0.0, %v510
        %512 = vdwg.mxu0
        %513 = vmatprep.subr.mxu0 %v422
        %514 = vmatpush1.msra.mxu0 %v421
        %515 = vmatprep.subr.mxu0 %v426
        %516 = vmatpush1.msra.mxu0 %v425
        %517 = vmatprep.subr.mxu0 0.0
        %518 = vmatpush1.msra.mxu0 0.0
        %519 = vmatprep.subr.mxu0 0.0
        %520 = vmatpush1.msra.mxu0 0.0
        %521 = vmatprep.subr.mxu0 0.0
        %522 = vmatpush1.msra.mxu0 0.0
        %523 = vmatprep.subr.mxu0 0.0
        %524 = vmatpush1.msra.mxu0 0.0
        %525 = vmatprep.subr.mxu0 0.0
        %526 = vmatpush1.msra.mxu0 0.0
        %527 = vmatprep.subr.mxu0 0.0
        %528 = vmatpush1.msra.mxu0 0.0
        %529 = vmatprep.subr.mxu0 0.0
        %530 = vmatpush1.msra.mxu0 0.0
        %531 = vmatprep.subr.mxu0 0.0
        %532 = vmatpush1.msra.mxu0 0.0
        %533 = vmatprep.subr.mxu0 0.0
        %534 = vmatpush1.msra.mxu0 0.0
        %535 = vmatprep.subr.mxu0 0.0
        %536 = vmatpush1.msra.mxu0 0.0
        %537 = vmatprep.subr.mxu0 0.0
        %538 = vmatpush1.msra.mxu0 0.0
        %539 = vmatprep.subr.mxu0 0.0
        %540 = vmatpush1.msra.mxu0 0.0
        %541 = vmatprep.subr.mxu0 0.0
        %542 = vmatpush1.msra.mxu0 0.0
        %543 = vmatprep.subr.mxu0 0.0
        %544 = vmatpush1.msra.mxu0 0.0
        %545 = vmatprep.subr.mxu0 0.0
        %546 = vmatpush1.msra.mxu0 0.0
        %547 = vmatprep.subr.mxu0 0.0
        %548 = vmatpush1.msra.mxu0 0.0
        %549 = vmatprep.subr.mxu0 0.0
        %550 = vmatpush1.msra.mxu0 0.0
        %551 = vmatprep.subr.mxu0 0.0
        %552 = vmatpush1.msra.mxu0 0.0
        %553 = vmatprep.subr.mxu0 0.0
        %554 = vmatpush1.msra.mxu0 0.0
        %555 = vmatprep.subr.mxu0 0.0
        %556 = vmatpush1.msra.mxu0 0.0
        %557 = vmatprep.subr.mxu0 0.0
        %558 = vmatpush1.msra.mxu0 0.0
        %559 = vmatprep.subr.mxu0 0.0
        %560 = vmatpush1.msra.mxu0 0.0
        %561 = vmatprep.subr.mxu0 0.0
        %562 = vmatpush1.msra.mxu0 0.0
        %563 = vmatprep.subr.mxu0 0.0
        %564 = vmatpush1.msra.mxu0 0.0
        %565 = vmatprep.subr.mxu0 0.0
        %566 = vmatpush1.msra.mxu0 0.0
        %567 = vmatprep.subr.mxu0 0.0
        %568 = vmatpush1.msra.mxu0 0.0
        %569 = vmatprep.subr.mxu0 0.0
        %570 = vmatpush1.msra.mxu0 0.0
        %571 = vmatprep.subr.mxu0 0.0
        %572 = vmatpush1.msra.mxu0 0.0
        %573 = vmatprep.subr.mxu0 0.0
        %574 = vmatpush1.msra.mxu0 0.0
        %575 = vmatprep.subr.mxu0 0.0
        %576 = vmatpush1.msra.mxu0 0.0
        %577 = vmatprep.mubr.f32.mxu0 0.0
        %578 = vmatmul.mubr.f32.gmra.mrb[0].mxu0 %v431
        %v579 = vpop.f32.mrb[0].mxu0
        %v580 = vadd.f32 0.0, %v579
        %v581 = vpop.f32.mrb[0].mxu0
        %v582 = vadd.f32 0.0, %v581
        %583 = vmatprep.mubr.f32.mxu0 0.0
        %584 = vmatmul.mubr.f32.gmra.mrb[0].mxu0 %v434
        %v585 = vpop.f32.mrb[0].mxu0
        %v586 = vadd.f32 0.0, %v585
        %v587 = vpop.f32.mrb[0].mxu0
        %v588 = vadd.f32 0.0, %v587
        %589 = vdwg.mxu0
        %v590 = vtanh.pop %v503
        %v591 = vtanh.pop %v505
        %v592 = vtanh.pop %v580
        %v593 = vtanh.pop %v582
        %v594 = vtanh.pop %v509
        %v595 = vtanh.pop %v511
        %v596 = vtanh.pop %v586
        %v597 = vtanh.pop %v588
        %s598 = scalar_lea.vmem [#allocation6], 32
        %v599 = vld [vmem:[%s598] sm:$0xff]
        %v600 = vld [vmem:[%s598 + $0x8] sm:$0xff]
        %v602 = vsel %vm258, %v599, 0
        %v605 = vsel %vm258, %v600, 0
        %607 = vmatprep.subr.mxu0 %v591
        %608 = vmatpush1.msra.mxu0 %v590
        %609 = vmatprep.subr.mxu0 %v595
        %610 = vmatpush1.msra.mxu0 %v594
        %611 = vmatprep.subr.mxu0 0.0
        %612 = vmatpush1.msra.mxu0 0.0
        %613 = vmatprep.subr.mxu0 0.0
        %614 = vmatpush1.msra.mxu0 0.0
        %615 = vmatprep.subr.mxu0 0.0
        %616 = vmatpush1.msra.mxu0 0.0
        %617 = vmatprep.subr.mxu0 0.0
        %618 = vmatpush1.msra.mxu0 0.0
        %619 = vmatprep.subr.mxu0 0.0
        %620 = vmatpush1.msra.mxu0 0.0
        %621 = vmatprep.subr.mxu0 0.0
        %622 = vmatpush1.msra.mxu0 0.0
        %623 = vmatprep.subr.mxu0 0.0
        %624 = vmatpush1.msra.mxu0 0.0
        %625 = vmatprep.subr.mxu0 0.0
        %626 = vmatpush1.msra.mxu0 0.0
        %627 = vmatprep.subr.mxu0 0.0
        %628 = vmatpush1.msra.mxu0 0.0
        %629 = vmatprep.subr.mxu0 0.0
        %630 = vmatpush1.msra.mxu0 0.0
        %631 = vmatprep.subr.mxu0 0.0
        %632 = vmatpush1.msra.mxu0 0.0
        %633 = vmatprep.subr.mxu0 0.0
        %634 = vmatpush1.msra.mxu0 0.0
        %635 = vmatprep.subr.mxu0 0.0
        %636 = vmatpush1.msra.mxu0 0.0
        %637 = vmatprep.subr.mxu0 0.0
        %638 = vmatpush1.msra.mxu0 0.0
        %639 = vmatprep.subr.mxu0 0.0
        %640 = vmatpush1.msra.mxu0 0.0
        %641 = vmatprep.subr.mxu0 0.0
        %642 = vmatpush1.msra.mxu0 0.0
        %643 = vmatprep.subr.mxu0 0.0
        %644 = vmatpush1.msra.mxu0 0.0
        %645 = vmatprep.subr.mxu0 0.0
        %646 = vmatpush1.msra.mxu0 0.0
        %647 = vmatprep.subr.mxu0 0.0
        %648 = vmatpush1.msra.mxu0 0.0
        %649 = vmatprep.subr.mxu0 0.0
        %650 = vmatpush1.msra.mxu0 0.0
        %651 = vmatprep.subr.mxu0 0.0
        %652 = vmatpush1.msra.mxu0 0.0
        %653 = vmatprep.subr.mxu0 0.0
        %654 = vmatpush1.msra.mxu0 0.0
        %655 = vmatprep.subr.mxu0 0.0
        %656 = vmatpush1.msra.mxu0 0.0
        %657 = vmatprep.subr.mxu0 0.0
        %658 = vmatpush1.msra.mxu0 0.0
        %659 = vmatprep.subr.mxu0 0.0
        %660 = vmatpush1.msra.mxu0 0.0
        %661 = vmatprep.subr.mxu0 0.0
        %662 = vmatpush1.msra.mxu0 0.0
        %663 = vmatprep.subr.mxu0 0.0
        %664 = vmatpush1.msra.mxu0 0.0
        %665 = vmatprep.subr.mxu0 0.0
        %666 = vmatpush1.msra.mxu0 0.0
        %667 = vmatprep.subr.mxu0 0.0
        %668 = vmatpush1.msra.mxu0 0.0
        %669 = vmatprep.subr.mxu0 0.0
        %670 = vmatpush1.msra.mxu0 0.0
        %671 = vmatprep.mubr.f32.mxu0 0.0
        %672 = vmatmul.mubr.f32.gmra.mrb[0].mxu0 %v602
        %v673 = vpop.f32.mrb[0].mxu0
        %v674 = vadd.f32 0.0, %v673
        %v675 = vpop.f32.mrb[0].mxu0
        %v676 = vadd.f32 0.0, %v675
        %677 = vmatprep.mubr.f32.mxu0 0.0
        %678 = vmatmul.mubr.f32.gmra.mrb[0].mxu0 %v605
        %v679 = vpop.f32.mrb[0].mxu0
        %v680 = vadd.f32 0.0, %v679
        %v681 = vpop.f32.mrb[0].mxu0
        %v682 = vadd.f32 0.0, %v681
        %683 = vdwg.mxu0
        %684 = vmatprep.subr.mxu0 %v593
        %685 = vmatpush1.msra.mxu0 %v592
        %686 = vmatprep.subr.mxu0 %v597
        %687 = vmatpush1.msra.mxu0 %v596
        %688 = vmatprep.subr.mxu0 0.0
        %689 = vmatpush1.msra.mxu0 0.0
        %690 = vmatprep.subr.mxu0 0.0
        %691 = vmatpush1.msra.mxu0 0.0
        %692 = vmatprep.subr.mxu0 0.0
        %693 = vmatpush1.msra.mxu0 0.0
        %694 = vmatprep.subr.mxu0 0.0
        %695 = vmatpush1.msra.mxu0 0.0
        %696 = vmatprep.subr.mxu0 0.0
        %697 = vmatpush1.msra.mxu0 0.0
        %698 = vmatprep.subr.mxu0 0.0
        %699 = vmatpush1.msra.mxu0 0.0
        %700 = vmatprep.subr.mxu0 0.0
        %701 = vmatpush1.msra.mxu0 0.0
        %702 = vmatprep.subr.mxu0 0.0
        %703 = vmatpush1.msra.mxu0 0.0
        %704 = vmatprep.subr.mxu0 0.0
        %705 = vmatpush1.msra.mxu0 0.0
        %706 = vmatprep.subr.mxu0 0.0
        %707 = vmatpush1.msra.mxu0 0.0
        %708 = vmatprep.subr.mxu0 0.0
        %709 = vmatpush1.msra.mxu0 0.0
        %710 = vmatprep.subr.mxu0 0.0
        %711 = vmatpush1.msra.mxu0 0.0
        %712 = vmatprep.subr.mxu0 0.0
        %713 = vmatpush1.msra.mxu0 0.0
        %714 = vmatprep.subr.mxu0 0.0
        %715 = vmatpush1.msra.mxu0 0.0
        %716 = vmatprep.subr.mxu0 0.0
        %717 = vmatpush1.msra.mxu0 0.0
        %718 = vmatprep.subr.mxu0 0.0
        %719 = vmatpush1.msra.mxu0 0.0
        %720 = vmatprep.subr.mxu0 0.0
        %721 = vmatpush1.msra.mxu0 0.0
        %722 = vmatprep.subr.mxu0 0.0
        %723 = vmatpush1.msra.mxu0 0.0
        %724 = vmatprep.subr.mxu0 0.0
        %725 = vmatpush1.msra.mxu0 0.0
        %726 = vmatprep.subr.mxu0 0.0
        %727 = vmatpush1.msra.mxu0 0.0
        %728 = vmatprep.subr.mxu0 0.0
        %729 = vmatpush1.msra.mxu0 0.0
        %730 = vmatprep.subr.mxu0 0.0
        %731 = vmatpush1.msra.mxu0 0.0
        %732 = vmatprep.subr.mxu0 0.0
        %733 = vmatpush1.msra.mxu0 0.0
        %734 = vmatprep.subr.mxu0 0.0
        %735 = vmatpush1.msra.mxu0 0.0
        %736 = vmatprep.subr.mxu0 0.0
        %737 = vmatpush1.msra.mxu0 0.0
        %738 = vmatprep.subr.mxu0 0.0
        %739 = vmatpush1.msra.mxu0 0.0
        %740 = vmatprep.subr.mxu0 0.0
        %741 = vmatpush1.msra.mxu0 0.0
        %742 = vmatprep.subr.mxu0 0.0
        %743 = vmatpush1.msra.mxu0 0.0
        %744 = vmatprep.subr.mxu0 0.0
        %745 = vmatpush1.msra.mxu0 0.0
        %746 = vmatprep.subr.mxu0 0.0
        %747 = vmatpush1.msra.mxu0 0.0
        %748 = vmatprep.mubr.f32.mxu0 0.0
        %749 = vmatmul.mubr.f32.gmra.mrb[0].mxu0 %v602
        %v750 = vpop.f32.mrb[0].mxu0
        %v751 = vadd.f32 0.0, %v750
        %v752 = vpop.f32.mrb[0].mxu0
        %v753 = vadd.f32 0.0, %v752
        %754 = vmatprep.mubr.f32.mxu0 0.0
        %755 = vmatmul.mubr.f32.gmra.mrb[0].mxu0 %v605
        %v756 = vpop.f32.mrb[0].mxu0
        %v757 = vadd.f32 0.0, %v756
        %v758 = vpop.f32.mrb[0].mxu0
        %v759 = vadd.f32 0.0, %v758
        %760 = vdwg.mxu0
        %v761 = vtanh.pop %v674
        %v762 = vtanh.pop %v676
        %v763 = vtanh.pop %v751
        %v764 = vtanh.pop %v753
        %v765 = vtanh.pop %v680
        %v766 = vtanh.pop %v682
        %v767 = vtanh.pop %v757
        %v768 = vtanh.pop %v759
        %s769 = scalar_lea.vmem [#allocation6], 48
        %v770 = vld [vmem:[%s769] sm:$0xff]
        %v771 = vld [vmem:[%s769 + $0x8] sm:$0xff]
        %v773 = vsel %vm258, %v770, 0
        %v776 = vsel %vm258, %v771, 0
        %778 = vmatprep.subr.mxu0 %v762
        %779 = vmatpush1.msra.mxu0 %v761
        %780 = vmatprep.subr.mxu0 %v766
        %781 = vmatpush1.msra.mxu0 %v765
        %782 = vmatprep.subr.mxu0 0.0
        %783 = vmatpush1.msra.mxu0 0.0
        %784 = vmatprep.subr.mxu0 0.0
        %785 = vmatpush1.msra.mxu0 0.0
        %786 = vmatprep.subr.mxu0 0.0
        %787 = vmatpush1.msra.mxu0 0.0
        %788 = vmatprep.subr.mxu0 0.0
        %789 = vmatpush1.msra.mxu0 0.0
        %790 = vmatprep.subr.mxu0 0.0
        %791 = vmatpush1.msra.mxu0 0.0
        %792 = vmatprep.subr.mxu0 0.0
        %793 = vmatpush1.msra.mxu0 0.0
        %794 = vmatprep.subr.mxu0 0.0
        %795 = vmatpush1.msra.mxu0 0.0
        %796 = vmatprep.subr.mxu0 0.0
        %797 = vmatpush1.msra.mxu0 0.0
        %798 = vmatprep.subr.mxu0 0.0
        %799 = vmatpush1.msra.mxu0 0.0
        %800 = vmatprep.subr.mxu0 0.0
        %801 = vmatpush1.msra.mxu0 0.0
        %802 = vmatprep.subr.mxu0 0.0
        %803 = vmatpush1.msra.mxu0 0.0
        %804 = vmatprep.subr.mxu0 0.0
        %805 = vmatpush1.msra.mxu0 0.0
        %806 = vmatprep.subr.mxu0 0.0
        %807 = vmatpush1.msra.mxu0 0.0
        %808 = vmatprep.subr.mxu0 0.0
        %809 = vmatpush1.msra.mxu0 0.0
        %810 = vmatprep.subr.mxu0 0.0
        %811 = vmatpush1.msra.mxu0 0.0
        %812 = vmatprep.subr.mxu0 0.0
        %813 = vmatpush1.msra.mxu0 0.0
        %814 = vmatprep.subr.mxu0 0.0
        %815 = vmatpush1.msra.mxu0 0.0
        %816 = vmatprep.subr.mxu0 0.0
        %817 = vmatpush1.msra.mxu0 0.0
        %818 = vmatprep.subr.mxu0 0.0
        %819 = vmatpush1.msra.mxu0 0.0
        %820 = vmatprep.subr.mxu0 0.0
        %821 = vmatpush1.msra.mxu0 0.0
        %822 = vmatprep.subr.mxu0 0.0
        %823 = vmatpush1.msra.mxu0 0.0
        %824 = vmatprep.subr.mxu0 0.0
        %825 = vmatpush1.msra.mxu0 0.0
        %826 = vmatprep.subr.mxu0 0.0
        %827 = vmatpush1.msra.mxu0 0.0
        %828 = vmatprep.subr.mxu0 0.0
        %829 = vmatpush1.msra.mxu0 0.0
        %830 = vmatprep.subr.mxu0 0.0
        %831 = vmatpush1.msra.mxu0 0.0
        %832 = vmatprep.subr.mxu0 0.0
        %833 = vmatpush1.msra.mxu0 0.0
        %834 = vmatprep.subr.mxu0 0.0
        %835 = vmatpush1.msra.mxu0 0.0
        %836 = vmatprep.subr.mxu0 0.0
        %837 = vmatpush1.msra.mxu0 0.0
        %838 = vmatprep.subr.mxu0 0.0
        %839 = vmatpush1.msra.mxu0 0.0
        %840 = vmatprep.subr.mxu0 0.0
        %841 = vmatpush1.msra.mxu0 0.0
        %842 = vmatprep.mubr.f32.mxu0 0.0
        %843 = vmatmul.mubr.f32.gmra.mrb[0].mxu0 %v773
        %v844 = vpop.f32.mrb[0].mxu0
        %v845 = vadd.f32 0.0, %v844
        %v846 = vpop.f32.mrb[0].mxu0
        %v847 = vadd.f32 0.0, %v846
        %848 = vmatprep.mubr.f32.mxu0 0.0
        %849 = vmatmul.mubr.f32.gmra.mrb[0].mxu0 %v776
        %v850 = vpop.f32.mrb[0].mxu0
        %v851 = vpop.f32.mrb[0].mxu0
        %852 = vdwg.mxu0
        %853 = vmatprep.subr.mxu0 %v764
        %854 = vmatpush1.msra.mxu0 %v763
        %855 = vmatprep.subr.mxu0 %v768
        %856 = vmatpush1.msra.mxu0 %v767
        %857 = vmatprep.subr.mxu0 0.0
        %858 = vmatpush1.msra.mxu0 0.0
        %859 = vmatprep.subr.mxu0 0.0
        %860 = vmatpush1.msra.mxu0 0.0
        %861 = vmatprep.subr.mxu0 0.0
        %862 = vmatpush1.msra.mxu0 0.0
        %863 = vmatprep.subr.mxu0 0.0
        %864 = vmatpush1.msra.mxu0 0.0
        %865 = vmatprep.subr.mxu0 0.0
        %866 = vmatpush1.msra.mxu0 0.0
        %867 = vmatprep.subr.mxu0 0.0
        %868 = vmatpush1.msra.mxu0 0.0
        %869 = vmatprep.subr.mxu0 0.0
        %870 = vmatpush1.msra.mxu0 0.0
        %871 = vmatprep.subr.mxu0 0.0
        %872 = vmatpush1.msra.mxu0 0.0
        %873 = vmatprep.subr.mxu0 0.0
        %874 = vmatpush1.msra.mxu0 0.0
        %875 = vmatprep.subr.mxu0 0.0
        %876 = vmatpush1.msra.mxu0 0.0
        %877 = vmatprep.subr.mxu0 0.0
        %878 = vmatpush1.msra.mxu0 0.0
        %879 = vmatprep.subr.mxu0 0.0
        %880 = vmatpush1.msra.mxu0 0.0
        %881 = vmatprep.subr.mxu0 0.0
        %882 = vmatpush1.msra.mxu0 0.0
        %883 = vmatprep.subr.mxu0 0.0
        %884 = vmatpush1.msra.mxu0 0.0
        %885 = vmatprep.subr.mxu0 0.0
        %886 = vmatpush1.msra.mxu0 0.0
        %887 = vmatprep.subr.mxu0 0.0
        %888 = vmatpush1.msra.mxu0 0.0
        %889 = vmatprep.subr.mxu0 0.0
        %890 = vmatpush1.msra.mxu0 0.0
        %891 = vmatprep.subr.mxu0 0.0
        %892 = vmatpush1.msra.mxu0 0.0
        %893 = vmatprep.subr.mxu0 0.0
        %894 = vmatpush1.msra.mxu0 0.0
        %895 = vmatprep.subr.mxu0 0.0
        %896 = vmatpush1.msra.mxu0 0.0
        %897 = vmatprep.subr.mxu0 0.0
        %898 = vmatpush1.msra.mxu0 0.0
        %899 = vmatprep.subr.mxu0 0.0
        %900 = vmatpush1.msra.mxu0 0.0
        %901 = vmatprep.subr.mxu0 0.0
        %902 = vmatpush1.msra.mxu0 0.0
        %903 = vmatprep.subr.mxu0 0.0
        %904 = vmatpush1.msra.mxu0 0.0
        %905 = vmatprep.subr.mxu0 0.0
        %906 = vmatpush1.msra.mxu0 0.0
        %907 = vmatprep.subr.mxu0 0.0
        %908 = vmatpush1.msra.mxu0 0.0
        %909 = vmatprep.subr.mxu0 0.0
        %910 = vmatpush1.msra.mxu0 0.0
        %911 = vmatprep.subr.mxu0 0.0
        %912 = vmatpush1.msra.mxu0 0.0
        %913 = vmatprep.subr.mxu0 0.0
        %914 = vmatpush1.msra.mxu0 0.0
        %915 = vmatprep.subr.mxu0 0.0
        %916 = vmatpush1.msra.mxu0 0.0
        %917 = vmatprep.mubr.f32.mxu0 0.0
        %918 = vmatmul.mubr.f32.gmra.mrb[0].mxu0 %v773
        %v919 = vpop.f32.mrb[0].mxu0
        %v920 = vadd.f32 0.0, %v919
        %v921 = vpop.f32.mrb[0].mxu0
        %v922 = vadd.f32 0.0, %v921
        %923 = vmatprep.mubr.f32.mxu0 0.0
        %924 = vmatmul.mubr.f32.gmra.mrb[0].mxu0 %v776
        %v925 = vpop.f32.mrb[0].mxu0
        %v926 = vpop.f32.mrb[0].mxu0
        %927 = vdwg.mxu0
        %v928 = vtanh.pop %v845
        %v929 = vtanh.pop %v847
        %v930 = vtanh.pop %v920
        %v931 = vtanh.pop %v922
        %s932 = sld [smem:[#allocation2]]
        %v933 = vstv %s932
        %v934 = vmul.f32 %v928, %v933
        %v935 = vmul.f32 %v929, %v933
        %v936 = vmul.f32 %v930, %v933
        %v937 = vmul.f32 %v931, %v933
        %v942 = vcombine.low %v934, %v935
        %v943 = vcombine.low %v936, %v937
        %v945 = vunpack.c.l.s4 1966171168
        %v946 = vunpack.c.0.s8 %v945
        %v947 = vlaneseq
        %v948 = vshrl.u32 %v947, 7
        %v949 = vsub.s32 %v946, %v948
        %v950 = vrot.slane %v942, %v949
        %v952 = vunpack.c.l.s4 1966171168
        %v953 = vunpack.c.0.s8 %v952
        %v954 = vlaneseq
        %v955 = vshrl.u32 %v954, 7
        %v956 = vsub.s32 %v953, %v955
        %v957 = vrot.slane %v943, %v956
        %v958 = vcombine.low %v950, %v957
        %v960 = vunpack.c.l.s4 1966171168
        %v961 = vunpack.c.0.s8 %v960
        %v962 = vlaneseq
        %v963 = vshrl.u32 %v962, 7
        %v964 = vsub.s32 %v961, %v963
        %v965 = vrot.slane %v958, %v964
        %v967 = vlaneseq
        %vm968 = vcmp.ge.s32.totalorder %v967, 0
        %vm969 = vcmp.lt.s32.totalorder %v967, 512
        %vm970 = vmand %vm968, %vm969
        %971 = vst.msk [vmem:[%s202] sm:$0xf] %vm970, %v965
        %s972 = sand.u32 %s98, 1
        %s973 = scalar_lea.sflag [#allocation5], %s972
        %s974 = sand.u32 %s98, 1
        %s975 = smul.addr %s974, 4
        %s976 = scalar_lea.vmem [#allocation8], %s975
        // Predicated region
        $region41: #{tpu_custom_call.1} parent=31 // pred_check
          %p977 = pneg %p108
        $region42: #{tpu_custom_call.1} parent=31 // pred_check_branch
          %979 = sbr.rel (%p977) target = $region44
        $region43: #{tpu_custom_call.1} parent=31 // pred_region
          %s980 = smul.u32 4, %s22
          %s982 = ssub.s32 64, 64
          %983 = vsyncadd %s973, %s982
          %s984 = smul.addr %s980, 16
          %s985 = scalar_lea.hbm %s3, %s984
          %s987 = sshll.u32 %s976, 4
          %s988 = int_to_ptr.vmem [resolvable:$true] %s987
          %990 = dma.vmem_to_hbm [thread:$0]  %s988, 64, %s985, %s973
        $region44: #{tpu_custom_call.1} parent=31 // pred_fallthru
          _
      $region32: #{tpu_custom_call.1} parent=5 // pred_fallthru
        _
      %p991 = scmp.le.s32.totalorder 2, %s17
      // Predicated region
      $region45: #{tpu_custom_call.1} parent=5 // pred_check
        %p992 = pneg %p991
      $region46: #{tpu_custom_call.1} parent=5 // pred_check_branch
        %994 = sbr.rel (%p992) target = $region48
      $region47: #{tpu_custom_call.1} parent=5 // pred_region
        %s995 = ssub.s32 %s17, 2
        // Predicated region
        $region49: #{tpu_custom_call.1} parent=47 // pred_check
          %p996 = pneg %p114
        $region50: #{tpu_custom_call.1} parent=47 // pred_check_branch
          %998 = sbr.rel (%p996) target = $region52
        $region51: #{tpu_custom_call.1} parent=47 // pred_region
          %s999 = sand.u32 %s99, 1
          %s1000 = scalar_lea.sflag [#allocation5], %s999
          %s1001 = sand.u32 %s99, 1
          %s1002 = smul.addr %s1001, 4
          %s1003 = scalar_lea.vmem [#allocation8], %s1002
          %1004 = dma.done %s1000, 64
        $region52: #{tpu_custom_call.1} parent=47 // pred_fallthru
          _
      $region48: #{tpu_custom_call.1} parent=5 // pred_fallthru
        _
    $region6: #{tpu_custom_call.1} parent=1 // loop_footer
      %s21 = sadd.s32 1, %s17
    $region7: #{tpu_custom_call.1} parent=1 // loop_footer_branch
      %16 = sbr.rel target = $region3
    $region8: #{tpu_custom_call.1} parent=1 // loop_exit
      _
    %1005 = vsyncpa [#allocation4], 1
    %s1006 = scalar_lea.sflag [#allocation4], 1
    %1007 = vsyncpa %s1006, 1
    %1008 = vsyncpa [#allocation7], 1
    %1009 = vsyncpa [#allocation5], 1
    %s1010 = scalar_lea.sflag [#allocation5], 1
    %1011 = vsyncpa %s1010, 1

</llo_original>
